<compile_context>
chip_gen: v6e
topology: v6e:2x2x1
jax: 0.10.0
libtpu: 0.0.40
codegen_flags: <defaults>
</compile_context>

<pallas_src>
import numpy as np
import jax
import jax.numpy as jnp
from jax import lax
from jax.experimental import pallas as pl
from jax.experimental.pallas import tpu as pltpu


# --------------------------------------------------------------------------
# Fused kernel
# --------------------------------------------------------------------------
def _masked_logsoftmax_entropy(logits):
    # logits may contain -inf on masked lanes; probs there are exactly 0.
    m = jnp.max(logits, axis=-1, keepdims=True)
    lp = logits - m                                  # -inf on masked lanes
    e = jnp.exp(lp)                                  # 0 on masked lanes
    z = jnp.sum(e, axis=-1, keepdims=True)
    logz = jnp.log(z)
    logp = lp - logz
    probs = e / z
    ent = -jnp.sum(jnp.where(probs > 0, probs * logp, 0.0), axis=-1, keepdims=True)
    return logp, ent


def _actor_fused_kernel(scal_ref, feat_ref, w1_ref, wq_ref, mask1_ref,
                        allowed2_ref, g1_ref, g2_ref, acts_ref, stats_ref):
    # scal_ref (SMEM, (3,)):  [b1, w2, b2]
    # feat_ref (VMEM, (TB, N, F)), w1_ref (1, F), wq_ref (F, F)
    # mask1_ref (TB, N), allowed2_ref (TB, N, N) {0,1}, g1/g2_ref (TB, N) gumbel
    # acts_ref (TB, 2) int32, stats_ref (TB, 4) f32 = [lp1, lp2, ent1, ent2]
    tb, n, f = feat_ref.shape
    b1 = scal_ref[0]
    w2 = scal_ref[1]
    b2 = scal_ref[2]

    feat = feat_ref[...]                                   # (tb, n, f)
    w1 = w1_ref[...].reshape(1, 1, f)                      # (1, 1, f)

    # ---- stage 1: ResNetBlock(F -> 1) scores (VPU multiply + lane reduce) ----
    x1 = jnp.sum(feat * w1, axis=-1) + b1                  # (tb, n)
    h = jnp.maximum(x1, 0.0)                               # ReLU
    h = jnp.maximum(h * w2 + b2, 0.0)                      # Linear(1,1) + ReLU
    scores1 = h + x1                                       # residual; output_seq == id

    logits1 = scores1 + mask1_ref[...]
    logp1, ent1 = _masked_logsoftmax_entropy(logits1)

    # ---- sample act1: Gumbel-max == Categorical(logits1) ----
    idx = lax.broadcasted_iota(jnp.int32, (tb, n), 1)      # shared by both stages
    y1 = logits1 + g1_ref[...]
    m1 = jnp.max(y1, axis=-1, keepdims=True)
    act1 = jnp.min(jnp.where(y1 == m1, idx, n), axis=-1, keepdims=True)   # (tb, 1)
    onehot1 = idx == act1                                                 # (tb, n)
    lp1 = jnp.sum(jnp.where(onehot1, logp1, 0.0), axis=-1, keepdims=True)

    # ---- gather prev node feature & allowed-candidate row via one-hot select ----
    oh1 = onehot1.astype(jnp.float32)                      # (tb, n)
    prev = jnp.sum(feat * oh1[:, :, None], axis=1)         # (tb, f)
    allow2 = jnp.sum(allowed2_ref[...] * oh1[:, :, None], axis=1)   # (tb, n)
    mask2 = jnp.where(allow2 > 0.5, 0.0, -jnp.inf)

    # ---- stage 2: act_query = tanh(prev @ Wq.T) (one MXU matmul) ----
    q = jnp.tanh(lax.dot_general(prev, wq_ref[...], (((1,), (1,)), ((), ())),
                                 preferred_element_type=jnp.float32))    # (tb, f)
    scores2 = jnp.sum(q[:, None, :] * feat, axis=-1)        # (tb, n)

    logits2 = scores2 + mask2
    logp2, ent2 = _masked_logsoftmax_entropy(logits2)

    y2 = logits2 + g2_ref[...]
    m2 = jnp.max(y2, axis=-1, keepdims=True)
    act2 = jnp.min(jnp.where(y2 == m2, idx, n), axis=-1, keepdims=True)
    onehot2 = idx == act2
    lp2 = jnp.sum(jnp.where(onehot2, logp2, 0.0), axis=-1, keepdims=True)

    # ---- packed outputs (single store per output ref) ----
    col2 = lax.broadcasted_iota(jnp.int32, (tb, 2), 1)
    acts_ref[...] = jnp.where(col2 == 0, act1, act2)
    col4 = lax.broadcasted_iota(jnp.int32, (tb, 4), 1)
    stats_ref[...] = jnp.where(col4 == 0, lp1,
                        jnp.where(col4 == 1, lp2,
                            jnp.where(col4 == 2, ent1, ent2)))


def _pick_batch_tile(B, N, F):
    """Largest batch tile whose per-step blocks stay well inside VMEM."""
    if B <= 8:
        return B                      # block == full array dim -> always legal
    # dominant per-row VMEM bytes: feat (N*F) + allowed2 (N*N) + 4 small (N,) rows,
    # double-buffered by the BlockSpec pipeline.
    per_row = 4 * (N * F + N * N + 4 * N)
    budget = 8 * 1024 * 1024          # per-buffer budget (conservative for v7x 64 MiB)
    tb = max(8, min(B, budget // max(per_row, 1)))
    tb = (tb // 8) * 8                # keep second-minor dim 8-aligned
    return min(tb, 512)


def _actor_fused_call(feat, w1, scalars, wq, mask1, allowed2, g1, g2):
    B, N, F = feat.shape
    tb = _pick_batch_tile(B, N, F)
    grid = (pl.cdiv(B, tb),)
    return pl.pallas_call(
        _actor_fused_kernel,
        out_shape=(jax.ShapeDtypeStruct((B, 2), jnp.int32),
                   jax.ShapeDtypeStruct((B, 4), jnp.float32)),
        grid=grid,
        in_specs=[
            pl.BlockSpec(memory_space=pltpu.MemorySpace.SMEM),   # [b1, w2, b2]
            pl.BlockSpec((tb, N, F), lambda i: (i, 0, 0)),       # feat
            pl.BlockSpec((1, F), lambda i: (0, 0)),              # W1
            pl.BlockSpec((F, F), lambda i: (0, 0)),              # Wq
            pl.BlockSpec((tb, N), lambda i: (i, 0)),             # mask1
            pl.BlockSpec((tb, N, N), lambda i: (i, 0, 0)),       # allowed2 table
            pl.BlockSpec((tb, N), lambda i: (i, 0)),             # gumbel noise 1
            pl.BlockSpec((tb, N), lambda i: (i, 0)),             # gumbel noise 2
        ],
        out_specs=(pl.BlockSpec((tb, 2), lambda i: (i, 0)),
                   pl.BlockSpec((tb, 4), lambda i: (i, 0))),
        compiler_params=pltpu.CompilerParams(dimension_semantics=("parallel",)),
    )(scalars, feat, w1, wq, mask1, allowed2, g1, g2)


# --------------------------------------------------------------------------
# Host-side glue: dense mask/table construction from the python dicts
# (inherently host work in the PyTorch module too), and the jitted forward.
# --------------------------------------------------------------------------
def build_mask1(batch_size, num_nodes, edge_candidates):
    masks = np.full((batch_size, num_nodes), -np.inf, dtype=np.float32)
    for b in range(batch_size):
        for node, candidates in edge_candidates[b].items():
            if len(candidates) > 0:
                masks[b, node] = 0.0
    return jnp.asarray(masks)


def build_allowed2_table(batch_size, num_nodes, edge_candidates):
    # allowed[b, n, j] = 1.0 iff j is a candidate of node n in batch element b.
    table = np.zeros((batch_size, num_nodes, num_nodes), dtype=np.float32)
    for b in range(batch_size):
        for node, candidates in edge_candidates[b].items():
            for j in candidates:
                table[b, node, j] = 1.0
    return jnp.asarray(table)


@jax.jit
def _device_forward(params, input_feat, mask1, allowed2, key):
    B, N, _ = input_feat.shape
    k1, k2 = jax.random.split(key)
    # Gumbel-max sampling == Categorical sampling (jax.random, not torch RNG).
    g1 = jax.random.gumbel(k1, (B, N), jnp.float32)
    g2 = jax.random.gumbel(k2, (B, N), jnp.float32)
    scalars = jnp.stack([params["b1"], params["w2"], params["b2"]]).astype(jnp.float32)
    acts_b2, stats_b4 = _actor_fused_call(
        input_feat, params["W1"], scalars, params["Wq"], mask1, allowed2, g1, g2)
    acts = acts_b2.T                      # (2, B)
    log_probs = stats_b4[:, :2].T         # (2, B)
    entropy = stats_b4[:, 2] + stats_b4[:, 3]   # (B,)
    return acts, log_probs, entropy


def actor_net_forward(params, input_feat, edge_candidates, key):
    B, N, _ = input_feat.shape
    mask1 = build_mask1(B, N, edge_candidates)
    allowed2 = build_allowed2_table(B, N, edge_candidates)
    return _device_forward(params, input_feat, mask1, allowed2, key)


# --------------------------------------------------------------------------
# NumPy reference (correctness check of logp / entropy given sampled actions).
# --------------------------------------------------------------------------
def _lsm_np(logits):
    m = logits.max(axis=-1, keepdims=True)
    lp = logits - m
    z = np.exp(lp).sum(axis=-1, keepdims=True)
    logp = lp - np.log(z)
    p = np.exp(logp)
    plp = np.zeros_like(p)
    nz = p > 0
    plp[nz] = p[nz] * logp[nz]
    return logp, -plp.sum(axis=-1)


def _reference_check(params, feat_np, edge_candidates, acts, log_probs, entropy):
    B, N, F = feat_np.shape
    W1 = np.asarray(params["W1"], np.float32)
    b1 = float(params["b1"]); w2 = float(params["w2"]); b2 = float(params["b2"])
    Wq = np.asarray(params["Wq"], np.float32)

    mask1 = np.full((B, N), -np.inf, np.float32)
    for b in range(B):
        for node, cand in edge_candidates[b].items():
            if len(cand) > 0:
                mask1[b, node] = 0.0
    x1 = feat_np @ W1[0] + b1
    h = np.maximum(x1, 0.0)
    h = np.maximum(h * w2 + b2, 0.0)
    logp1, ent1 = _lsm_np(h + x1 + mask1)

    a1 = np.asarray(acts[0]); a2 = np.asarray(acts[1])
    prev = feat_np[np.arange(B), a1]
    q = np.tanh(prev @ Wq.T)
    s2 = (q[:, None, :] * feat_np).sum(-1)
    mask2 = np.full((B, N), -np.inf, np.float32)
    for b in range(B):
        for j in edge_candidates[b][int(a1[b])]:
            mask2[b, j] = 0.0
    logp2, ent2 = _lsm_np(s2 + mask2)

    np.testing.assert_allclose(np.asarray(log_probs[0]), logp1[np.arange(B), a1],
                               rtol=1e-3, atol=1e-3)
    np.testing.assert_allclose(np.asarray(log_probs[1]), logp2[np.arange(B), a2],
                               rtol=1e-3, atol=1e-3)
    np.testing.assert_allclose(np.asarray(entropy), ent1 + ent2, rtol=1e-3, atol=1e-3)


if __name__ == "__main__":
    B, N, F = 2, 8, 32   # batch, num_nodes, state_feature_size

    key = jax.random.PRNGKey(0)
    kW1, kb1, kw2, kb2, kWq, kfeat, ksample = jax.random.split(key, 7)

    # ResNetBlock(F, 1): first_linear Linear(F,1); middle Linear(1,1); last_linear unused.
    params = {
        "W1": jax.random.normal(kW1, (1, F), jnp.float32) * 0.1,
        "b1": jax.random.normal(kb1, (), jnp.float32) * 0.1,
        "w2": jax.random.normal(kw2, (), jnp.float32) * 0.1,
        "b2": jax.random.normal(kb2, (), jnp.float32) * 0.1,
        "Wq": jax.random.normal(kWq, (F, F), jnp.float32) * 0.1,   # Linear(F,F,bias=False)
    }
    input_feat = jax.random.normal(kfeat, (B, N, F), jnp.float32)

    # edge_candidates: per-batch dict {node: candidate set}, as in the PyTorch model
    edge_candidates = [
        {node: {(node + 1) % N, (node + 3) % N} for node in range(N)} for _ in range(B)
    ]

    acts, log_probs, entropy = actor_net_forward(params, input_feat, edge_candidates, ksample)
    jax.block_until_ready((acts, log_probs, entropy))

    assert acts.shape == (2, B)
    assert log_probs.shape == (2, B)
    assert entropy.shape == (B,)
    assert bool(jnp.all(jnp.isfinite(log_probs))) and bool(jnp.all(jnp.isfinite(entropy)))

    # sampled actions must respect the candidate structure
    a1 = np.asarray(acts[0]); a2 = np.asarray(acts[1])
    for b in range(B):
        assert len(edge_candidates[b][int(a1[b])]) > 0
        assert int(a2[b]) in edge_candidates[b][int(a1[b])]

    # numerical check of log-probs / entropy against a NumPy reference
    _reference_check(params, np.asarray(input_feat), edge_candidates, acts, log_probs, entropy)

    # TODO(synk): sampling uses jax.random Gumbel-max (not bit-identical to torch RNG).
    print("KERNEL_OK")
</pallas_src>

<mosaic_0001>
module attributes {stable_mosaic.version = 11 : i64} {
  func.func @_actor_fused_kernel(%arg0: i32, %arg1: memref<3xf32, #tpu.memory_space<smem>>, %arg2: memref<2x8x32xf32, #tpu.memory_space<vmem>>, %arg3: memref<1x32xf32, #tpu.memory_space<vmem>>, %arg4: memref<32x32xf32, #tpu.memory_space<vmem>>, %arg5: memref<2x8xf32, #tpu.memory_space<vmem>>, %arg6: memref<2x8x8xf32, #tpu.memory_space<vmem>>, %arg7: memref<2x8xf32, #tpu.memory_space<vmem>>, %arg8: memref<2x8xf32, #tpu.memory_space<vmem>>, %arg9: memref<2x2xi32, #tpu.memory_space<vmem>>, %arg10: memref<2x4xf32, #tpu.memory_space<vmem>>) attributes {dimension_semantics = [#tpu.dimension_semantics<parallel>], iteration_bounds = array<i64: 1>, scalar_prefetch = 0 : i64, scratch_operands = 0 : i64, tpu.core_type = #tpu.core_type<tc>, window_params = [{transform_indices = @transform_0, window_bounds = array<i64: 3>}, {transform_indices = @transform_1, window_bounds = array<i64: 2, 8, 32>}, {pipeline_mode = #tpu.pipeline_mode<synchronous>, transform_indices = @transform_2, window_bounds = array<i64: 1, 32>}, {pipeline_mode = #tpu.pipeline_mode<synchronous>, transform_indices = @transform_3, window_bounds = array<i64: 32, 32>}, {transform_indices = @transform_4, window_bounds = array<i64: 2, 8>}, {transform_indices = @transform_5, window_bounds = array<i64: 2, 8, 8>}, {transform_indices = @transform_6, window_bounds = array<i64: 2, 8>}, {transform_indices = @transform_7, window_bounds = array<i64: 2, 8>}, {transform_indices = @transform_8, window_bounds = array<i64: 2, 2>}, {transform_indices = @transform_9, window_bounds = array<i64: 2, 4>}]} {
    %c0 = arith.constant 0 : index
    %0 = memref.load %arg1[%c0] : memref<3xf32, #tpu.memory_space<smem>>
    %c1 = arith.constant 1 : index
    %1 = memref.load %arg1[%c1] : memref<3xf32, #tpu.memory_space<smem>>
    %c2 = arith.constant 2 : index
    %2 = memref.load %arg1[%c2] : memref<3xf32, #tpu.memory_space<smem>>
    %c0_0 = arith.constant 0 : index
    %c0_1 = arith.constant 0 : index
    %c0_2 = arith.constant 0 : index
    %3 = vector.load %arg2[%c0_0, %c0_1, %c0_2] : memref<2x8x32xf32, #tpu.memory_space<vmem>>, vector<2x8x32xf32>
    %c0_3 = arith.constant 0 : index
    %c0_4 = arith.constant 0 : index
    %4 = vector.load %arg3[%c0_3, %c0_4] : memref<1x32xf32, #tpu.memory_space<vmem>>, vector<1x32xf32>
    %5 = vector.shape_cast %4 : vector<1x32xf32> to vector<1x1x32xf32>
    %6 = vector.broadcast %5 : vector<1x1x32xf32> to vector<2x8x32xf32>
    %7 = arith.mulf %3, %6 : vector<2x8x32xf32>
    %cst = arith.constant dense<0.000000e+00> : vector<2x8xf32>
    %8 = vector.multi_reduction <add>, %7, %cst [2] : vector<2x8x32xf32> to vector<2x8xf32>
    %9 = vector.broadcast %0 : f32 to vector<2x8xf32>
    %10 = arith.addf %8, %9 : vector<2x8xf32>
    %cst_5 = arith.constant 0.000000e+00 : f32
    %11 = vector.broadcast %cst_5 : f32 to vector<2x8xf32>
    %12 = arith.maximumf %10, %11 : vector<2x8xf32>
    %13 = vector.broadcast %1 : f32 to vector<2x8xf32>
    %14 = arith.mulf %12, %13 : vector<2x8xf32>
    %15 = vector.broadcast %2 : f32 to vector<2x8xf32>
    %16 = arith.addf %14, %15 : vector<2x8xf32>
    %cst_6 = arith.constant 0.000000e+00 : f32
    %17 = vector.broadcast %cst_6 : f32 to vector<2x8xf32>
    %18 = arith.maximumf %16, %17 : vector<2x8xf32>
    %19 = arith.addf %18, %10 : vector<2x8xf32>
    %c0_7 = arith.constant 0 : index
    %c0_8 = arith.constant 0 : index
    %20 = vector.load %arg5[%c0_7, %c0_8] : memref<2x8xf32, #tpu.memory_space<vmem>>, vector<2x8xf32>
    %21 = arith.addf %19, %20 : vector<2x8xf32>
    %cst_9 = arith.constant dense<0xFF800000> : vector<2xf32>
    %22 = vector.multi_reduction <maximumf>, %21, %cst_9 [1] : vector<2x8xf32> to vector<2xf32>
    %23 = vector.shape_cast %22 : vector<2xf32> to vector<2x1xf32>
    %24 = vector.broadcast %23 : vector<2x1xf32> to vector<2x8xf32>
    %25 = arith.subf %21, %24 : vector<2x8xf32>
    %26 = math.exp %25 : vector<2x8xf32>
    %cst_10 = arith.constant dense<0.000000e+00> : vector<2xf32>
    %27 = vector.multi_reduction <add>, %26, %cst_10 [1] : vector<2x8xf32> to vector<2xf32>
    %28 = vector.shape_cast %27 : vector<2xf32> to vector<2x1xf32>
    %29 = math.log %28 : vector<2x1xf32>
    %30 = vector.broadcast %29 : vector<2x1xf32> to vector<2x8xf32>
    %31 = arith.subf %25, %30 : vector<2x8xf32>
    %32 = vector.broadcast %28 : vector<2x1xf32> to vector<2x8xf32>
    %33 = arith.divf %26, %32 : vector<2x8xf32>
    %cst_11 = arith.constant 0.000000e+00 : f32
    %34 = vector.broadcast %cst_11 : f32 to vector<2x8xf32>
    %35 = arith.cmpf ogt, %33, %34 : vector<2x8xf32>
    %36 = arith.mulf %33, %31 : vector<2x8xf32>
    %cst_12 = arith.constant 0.000000e+00 : f32
    %37 = vector.broadcast %cst_12 : f32 to vector<2x8xf32>
    %38 = arith.select %35, %36, %37 : vector<2x8xi1>, vector<2x8xf32>
    %cst_13 = arith.constant dense<0.000000e+00> : vector<2xf32>
    %39 = vector.multi_reduction <add>, %38, %cst_13 [1] : vector<2x8xf32> to vector<2xf32>
    %40 = vector.shape_cast %39 : vector<2xf32> to vector<2x1xf32>
    %cst_14 = arith.constant 0.000000e+00 : f32
    %41 = vector.broadcast %cst_14 : f32 to vector<2x1xf32>
    %42 = arith.subf %41, %40 : vector<2x1xf32>
    %43 = tpu.iota {dimensions = array<i32: 1>} : vector<2x8xi32>
    %c0_15 = arith.constant 0 : index
    %c0_16 = arith.constant 0 : index
    %44 = vector.load %arg7[%c0_15, %c0_16] : memref<2x8xf32, #tpu.memory_space<vmem>>, vector<2x8xf32>
    %45 = arith.addf %21, %44 : vector<2x8xf32>
    %cst_17 = arith.constant dense<0xFF800000> : vector<2xf32>
    %46 = vector.multi_reduction <maximumf>, %45, %cst_17 [1] : vector<2x8xf32> to vector<2xf32>
    %47 = vector.shape_cast %46 : vector<2xf32> to vector<2x1xf32>
    %48 = vector.broadcast %47 : vector<2x1xf32> to vector<2x8xf32>
    %49 = arith.cmpf oeq, %45, %48 : vector<2x8xf32>
    %c8_i32 = arith.constant 8 : i32
    %50 = vector.broadcast %c8_i32 : i32 to vector<2x8xi32>
    %51 = arith.select %49, %43, %50 : vector<2x8xi1>, vector<2x8xi32>
    %cst_18 = arith.constant dense<2147483647> : vector<2xi32>
    %52 = vector.multi_reduction <minsi>, %51, %cst_18 [1] : vector<2x8xi32> to vector<2xi32>
    %53 = vector.shape_cast %52 : vector<2xi32> to vector<2x1xi32>
    %54 = vector.broadcast %53 : vector<2x1xi32> to vector<2x8xi32>
    %55 = arith.cmpi eq, %43, %54 : vector<2x8xi32>
    %cst_19 = arith.constant 0.000000e+00 : f32
    %56 = vector.broadcast %cst_19 : f32 to vector<2x8xf32>
    %57 = arith.select %55, %31, %56 : vector<2x8xi1>, vector<2x8xf32>
    %cst_20 = arith.constant dense<0.000000e+00> : vector<2xf32>
    %58 = vector.multi_reduction <add>, %57, %cst_20 [1] : vector<2x8xf32> to vector<2xf32>
    %59 = vector.shape_cast %58 : vector<2xf32> to vector<2x1xf32>
    %60 = arith.extui %55 : vector<2x8xi1> to vector<2x8xi32>
    %61 = arith.sitofp %60 : vector<2x8xi32> to vector<2x8xf32>
    %62 = vector.shape_cast %61 : vector<2x8xf32> to vector<2x8x1xf32>
    %63 = vector.broadcast %62 : vector<2x8x1xf32> to vector<2x8x32xf32>
    %64 = arith.mulf %3, %63 : vector<2x8x32xf32>
    %cst_21 = arith.constant dense<0.000000e+00> : vector<2x32xf32>
    %65 = vector.multi_reduction <add>, %64, %cst_21 [1] : vector<2x8x32xf32> to vector<2x32xf32>
    %c0_22 = arith.constant 0 : index
    %c0_23 = arith.constant 0 : index
    %c0_24 = arith.constant 0 : index
    %66 = vector.load %arg6[%c0_22, %c0_23, %c0_24] : memref<2x8x8xf32, #tpu.memory_space<vmem>>, vector<2x8x8xf32>
    %67 = vector.shape_cast %61 : vector<2x8xf32> to vector<2x8x1xf32>
    %68 = vector.broadcast %67 : vector<2x8x1xf32> to vector<2x8x8xf32>
    %69 = arith.mulf %66, %68 : vector<2x8x8xf32>
    %cst_25 = arith.constant dense<0.000000e+00> : vector<2x8xf32>
    %70 = vector.multi_reduction <add>, %69, %cst_25 [1] : vector<2x8x8xf32> to vector<2x8xf32>
    %cst_26 = arith.constant 5.000000e-01 : f32
    %71 = vector.broadcast %cst_26 : f32 to vector<2x8xf32>
    %72 = arith.cmpf ogt, %70, %71 : vector<2x8xf32>
    %cst_27 = arith.constant 0.000000e+00 : f32
    %cst_28 = arith.constant 0xFF800000 : f32
    %73 = vector.broadcast %cst_27 : f32 to vector<2x8xf32>
    %74 = vector.broadcast %cst_28 : f32 to vector<2x8xf32>
    %75 = arith.select %72, %73, %74 : vector<2x8xi1>, vector<2x8xf32>
    %c0_29 = arith.constant 0 : index
    %c0_30 = arith.constant 0 : index
    %76 = vector.load %arg4[%c0_29, %c0_30] : memref<32x32xf32, #tpu.memory_space<vmem>>, vector<32x32xf32>
    %cst_31 = arith.constant dense<0.000000e+00> : vector<2x32xf32>
    %77 = tpu.matmul %65, %76, %cst_31 {dimension_numbers = #tpu.dot_dimension_numbers<[1], [1], [0], [0], [0, 0, 1, 0], [], []>} : vector<2x32xf32>, vector<32x32xf32>, vector<2x32xf32> -> vector<2x32xf32>
    %78 = math.tanh %77 : vector<2x32xf32>
    %79 = vector.shape_cast %78 : vector<2x32xf32> to vector<2x1x32xf32>
    %80 = vector.broadcast %79 : vector<2x1x32xf32> to vector<2x8x32xf32>
    %81 = arith.mulf %80, %3 : vector<2x8x32xf32>
    %cst_32 = arith.constant dense<0.000000e+00> : vector<2x8xf32>
    %82 = vector.multi_reduction <add>, %81, %cst_32 [2] : vector<2x8x32xf32> to vector<2x8xf32>
    %83 = arith.addf %82, %75 : vector<2x8xf32>
    %cst_33 = arith.constant dense<0xFF800000> : vector<2xf32>
    %84 = vector.multi_reduction <maximumf>, %83, %cst_33 [1] : vector<2x8xf32> to vector<2xf32>
    %85 = vector.shape_cast %84 : vector<2xf32> to vector<2x1xf32>
    %86 = vector.broadcast %85 : vector<2x1xf32> to vector<2x8xf32>
    %87 = arith.subf %83, %86 : vector<2x8xf32>
    %88 = math.exp %87 : vector<2x8xf32>
    %cst_34 = arith.constant dense<0.000000e+00> : vector<2xf32>
    %89 = vector.multi_reduction <add>, %88, %cst_34 [1] : vector<2x8xf32> to vector<2xf32>
    %90 = vector.shape_cast %89 : vector<2xf32> to vector<2x1xf32>
    %91 = math.log %90 : vector<2x1xf32>
    %92 = vector.broadcast %91 : vector<2x1xf32> to vector<2x8xf32>
    %93 = arith.subf %87, %92 : vector<2x8xf32>
    %94 = vector.broadcast %90 : vector<2x1xf32> to vector<2x8xf32>
    %95 = arith.divf %88, %94 : vector<2x8xf32>
    %cst_35 = arith.constant 0.000000e+00 : f32
    %96 = vector.broadcast %cst_35 : f32 to vector<2x8xf32>
    %97 = arith.cmpf ogt, %95, %96 : vector<2x8xf32>
    %98 = arith.mulf %95, %93 : vector<2x8xf32>
    %cst_36 = arith.constant 0.000000e+00 : f32
    %99 = vector.broadcast %cst_36 : f32 to vector<2x8xf32>
    %100 = arith.select %97, %98, %99 : vector<2x8xi1>, vector<2x8xf32>
    %cst_37 = arith.constant dense<0.000000e+00> : vector<2xf32>
    %101 = vector.multi_reduction <add>, %100, %cst_37 [1] : vector<2x8xf32> to vector<2xf32>
    %102 = vector.shape_cast %101 : vector<2xf32> to vector<2x1xf32>
    %cst_38 = arith.constant 0.000000e+00 : f32
    %103 = vector.broadcast %cst_38 : f32 to vector<2x1xf32>
    %104 = arith.subf %103, %102 : vector<2x1xf32>
    %c0_39 = arith.constant 0 : index
    %c0_40 = arith.constant 0 : index
    %105 = vector.load %arg8[%c0_39, %c0_40] : memref<2x8xf32, #tpu.memory_space<vmem>>, vector<2x8xf32>
    %106 = arith.addf %83, %105 : vector<2x8xf32>
    %cst_41 = arith.constant dense<0xFF800000> : vector<2xf32>
    %107 = vector.multi_reduction <maximumf>, %106, %cst_41 [1] : vector<2x8xf32> to vector<2xf32>
    %108 = vector.shape_cast %107 : vector<2xf32> to vector<2x1xf32>
    %109 = vector.broadcast %108 : vector<2x1xf32> to vector<2x8xf32>
    %110 = arith.cmpf oeq, %106, %109 : vector<2x8xf32>
    %c8_i32_42 = arith.constant 8 : i32
    %111 = vector.broadcast %c8_i32_42 : i32 to vector<2x8xi32>
    %112 = arith.select %110, %43, %111 : vector<2x8xi1>, vector<2x8xi32>
    %cst_43 = arith.constant dense<2147483647> : vector<2xi32>
    %113 = vector.multi_reduction <minsi>, %112, %cst_43 [1] : vector<2x8xi32> to vector<2xi32>
    %114 = vector.shape_cast %113 : vector<2xi32> to vector<2x1xi32>
    %115 = vector.broadcast %114 : vector<2x1xi32> to vector<2x8xi32>
    %116 = arith.cmpi eq, %43, %115 : vector<2x8xi32>
    %cst_44 = arith.constant 0.000000e+00 : f32
    %117 = vector.broadcast %cst_44 : f32 to vector<2x8xf32>
    %118 = arith.select %116, %93, %117 : vector<2x8xi1>, vector<2x8xf32>
    %cst_45 = arith.constant dense<0.000000e+00> : vector<2xf32>
    %119 = vector.multi_reduction <add>, %118, %cst_45 [1] : vector<2x8xf32> to vector<2xf32>
    %120 = vector.shape_cast %119 : vector<2xf32> to vector<2x1xf32>
    %121 = tpu.iota {dimensions = array<i32: 1>} : vector<2x2xi32>
    %c0_i32 = arith.constant 0 : i32
    %122 = vector.broadcast %c0_i32 : i32 to vector<2x2xi32>
    %123 = arith.cmpi eq, %121, %122 : vector<2x2xi32>
    %124 = vector.shape_cast %53 : vector<2x1xi32> to vector<2x1xi32>
    %125 = vector.broadcast %124 : vector<2x1xi32> to vector<2x2xi32>
    %126 = vector.shape_cast %114 : vector<2x1xi32> to vector<2x1xi32>
    %127 = vector.broadcast %126 : vector<2x1xi32> to vector<2x2xi32>
    %128 = arith.select %123, %125, %127 : vector<2x2xi1>, vector<2x2xi32>
    %c0_46 = arith.constant 0 : index
    %c0_47 = arith.constant 0 : index
    %129 = vector.load %arg9[%c0_46, %c0_47] : memref<2x2xi32, #tpu.memory_space<vmem>>, vector<2x2xi32>
    tpu.vector_store %arg9[%c0_46, %c0_47], %128 {strides = array<i32>} : memref<2x2xi32, #tpu.memory_space<vmem>>, vector<2x2xi32>,
    %130 = tpu.iota {dimensions = array<i32: 1>} : vector<2x4xi32>
    %c0_i32_48 = arith.constant 0 : i32
    %131 = vector.broadcast %c0_i32_48 : i32 to vector<2x4xi32>
    %132 = arith.cmpi eq, %130, %131 : vector<2x4xi32>
    %c1_i32 = arith.constant 1 : i32
    %133 = vector.broadcast %c1_i32 : i32 to vector<2x4xi32>
    %134 = arith.cmpi eq, %130, %133 : vector<2x4xi32>
    %c2_i32 = arith.constant 2 : i32
    %135 = vector.broadcast %c2_i32 : i32 to vector<2x4xi32>
    %136 = arith.cmpi eq, %130, %135 : vector<2x4xi32>
    %137 = vector.shape_cast %42 : vector<2x1xf32> to vector<2x1xf32>
    %138 = vector.broadcast %137 : vector<2x1xf32> to vector<2x4xf32>
    %139 = vector.shape_cast %104 : vector<2x1xf32> to vector<2x1xf32>
    %140 = vector.broadcast %139 : vector<2x1xf32> to vector<2x4xf32>
    %141 = arith.select %136, %138, %140 : vector<2x4xi1>, vector<2x4xf32>
    %142 = vector.shape_cast %120 : vector<2x1xf32> to vector<2x1xf32>
    %143 = vector.broadcast %142 : vector<2x1xf32> to vector<2x4xf32>
    %144 = arith.select %134, %143, %141 : vector<2x4xi1>, vector<2x4xf32>
    %145 = vector.shape_cast %59 : vector<2x1xf32> to vector<2x1xf32>
    %146 = vector.broadcast %145 : vector<2x1xf32> to vector<2x4xf32>
    %147 = arith.select %132, %146, %144 : vector<2x4xi1>, vector<2x4xf32>
    %c0_49 = arith.constant 0 : index
    %c0_50 = arith.constant 0 : index
    %148 = vector.load %arg10[%c0_49, %c0_50] : memref<2x4xf32, #tpu.memory_space<vmem>>, vector<2x4xf32>
    tpu.vector_store %arg10[%c0_49, %c0_50], %147 {strides = array<i32>} : memref<2x4xf32, #tpu.memory_space<vmem>>, vector<2x4xf32>,
    return
  }
  func.func @transform_0(%arg0: i32) -> i32 {
    %c0_i32 = arith.constant 0 : i32
    %c0_i32_0 = arith.constant 0 : i32
    return %c0_i32 : i32
  }
  func.func @transform_1(%arg0: i32) -> (i32, i32, i32) {
    %c0_i32 = arith.constant 0 : i32
    %c0_i32_0 = arith.constant 0 : i32
    %c0_i32_1 = arith.constant 0 : i32
    return %arg0, %c0_i32, %c0_i32_0 : i32, i32, i32
  }
  func.func @transform_2(%arg0: i32) -> (i32, i32) {
    %c0_i32 = arith.constant 0 : i32
    %c0_i32_0 = arith.constant 0 : i32
    %c0_i32_1 = arith.constant 0 : i32
    return %c0_i32, %c0_i32_0 : i32, i32
  }
  func.func @transform_3(%arg0: i32) -> (i32, i32) {
    %c0_i32 = arith.constant 0 : i32
    %c0_i32_0 = arith.constant 0 : i32
    %c0_i32_1 = arith.constant 0 : i32
    return %c0_i32, %c0_i32_0 : i32, i32
  }
  func.func @transform_4(%arg0: i32) -> (i32, i32) {
    %c0_i32 = arith.constant 0 : i32
    %c0_i32_0 = arith.constant 0 : i32
    return %arg0, %c0_i32 : i32, i32
  }
  func.func @transform_5(%arg0: i32) -> (i32, i32, i32) {
    %c0_i32 = arith.constant 0 : i32
    %c0_i32_0 = arith.constant 0 : i32
    %c0_i32_1 = arith.constant 0 : i32
    return %arg0, %c0_i32, %c0_i32_0 : i32, i32, i32
  }
  func.func @transform_6(%arg0: i32) -> (i32, i32) {
    %c0_i32 = arith.constant 0 : i32
    %c0_i32_0 = arith.constant 0 : i32
    return %arg0, %c0_i32 : i32, i32
  }
  func.func @transform_7(%arg0: i32) -> (i32, i32) {
    %c0_i32 = arith.constant 0 : i32
    %c0_i32_0 = arith.constant 0 : i32
    return %arg0, %c0_i32 : i32, i32
  }
  func.func @transform_8(%arg0: i32) -> (i32, i32) {
    %c0_i32 = arith.constant 0 : i32
    %c0_i32_0 = arith.constant 0 : i32
    return %arg0, %c0_i32 : i32, i32
  }
  func.func @transform_9(%arg0: i32) -> (i32, i32) {
    %c0_i32 = arith.constant 0 : i32
    %c0_i32_0 = arith.constant 0 : i32
    return %arg0, %c0_i32 : i32, i32
  }
}

</mosaic_0001>

<llo_original>
// kernel: _device_forward.3
$region0: #{_device_forward.3}
  #allocation0 [shape = 'u32[]', space=smem, size = 0x4, offset = 0x4, fixed_abs, tag = 'smem constant byte address 0x4 - core index']
  #allocation1 [shape = 'u32[144,128]{1,0:T(1,128)}', space=vmem, size = 0x12000, scoped, tag = 'internal scratch']
  %s0 = inlined_call_operand.vmem [shape: f32[3], index: 0, kind: input, shape index: {}]
  %s1 = inlined_call_operand.vmem [shape: f32[2,8,32], index: 1, kind: input, shape index: {}]
  %s2 = inlined_call_operand.vmem [shape: f32[1,32], index: 2, kind: input, shape index: {}]
  %s3 = inlined_call_operand.vmem [shape: f32[32,32], index: 3, kind: input, shape index: {}]
  %s4 = inlined_call_operand.vmem [shape: f32[2,8], index: 4, kind: input, shape index: {}]
  %s5 = inlined_call_operand.vmem [shape: f32[2,8,8], index: 5, kind: input, shape index: {}]
  %s6 = inlined_call_operand.vmem [shape: f32[2,8], index: 6, kind: input, shape index: {}]
  %s7 = inlined_call_operand.vmem [shape: f32[2,8], index: 7, kind: input, shape index: {}]
  %s8 = inlined_call_operand.vmem [shape: s32[2,2], index: 8, kind: output, shape index: {0}]
  %s9 = inlined_call_operand.vmem [shape: f32[2,4], index: 9, kind: output, shape index: {1}]
  %10 = xla_tuple %s8, %s9
  %s11 = sld [smem:[#allocation0]]
  $region54: #{_device_forward.3} parent=0
    _
  %s13 = ssub.s32 1, %s11
  %s14 = scalar_select 0, %s13, %s11
  $region1: #{_device_forward.3} parent=0
    #allocation2 [shape = 'u8[512]{0}', space=smem, size = 0x200, scoped, tag = 'input window, operand 0, single buffered']
    #allocation3 [shape = 's32[1]{0}', space=sflag, size = 0x4, scoped, tag = 'scoped memory for _device_forward.3']
    %15 = vsyncpa [#allocation3], 0
    // Predicated region
    $region2: #{_device_forward.3} parent=1 // pred_check
      _
    $region3: #{_device_forward.3} parent=1 // pred_check_branch
      %17 = sbr.rel (0) target = $region5
    $region4: #{_device_forward.3} parent=1 // pred_region
      %s19 = ssub.s32 16, 16
      %20 = vsyncadd [#allocation3], %s19
      %s22 = sshll.u32 %s0, 4
      %s23 = int_to_ptr.vmem [resolvable:$true] %s22
      %25 = dma.vmem_to_smem %s23, 16, [#allocation2], [#allocation3]
    $region5: #{_device_forward.3} parent=1 // pred_fallthru
      _
    // Predicated region
    $region6: #{_device_forward.3} parent=1 // pred_check
      _
    $region7: #{_device_forward.3} parent=1 // pred_check_branch
      %27 = sbr.rel (0) target = $region9
    $region8: #{_device_forward.3} parent=1 // pred_region
      _
    $region9: #{_device_forward.3} parent=1 // pred_fallthru
      _
    // Predicated region
    $region10: #{_device_forward.3} parent=1 // pred_check
      _
    $region11: #{_device_forward.3} parent=1 // pred_check_branch
      %29 = sbr.rel (0) target = $region13
    $region12: #{_device_forward.3} parent=1 // pred_region
      _
    $region13: #{_device_forward.3} parent=1 // pred_fallthru
      _
    // Predicated region
    $region14: #{_device_forward.3} parent=1 // pred_check
      _
    $region15: #{_device_forward.3} parent=1 // pred_check_branch
      %31 = sbr.rel (0) target = $region17
    $region16: #{_device_forward.3} parent=1 // pred_region
      _
    $region17: #{_device_forward.3} parent=1 // pred_fallthru
      _
    // Predicated region
    $region18: #{_device_forward.3} parent=1 // pred_check
      _
    $region19: #{_device_forward.3} parent=1 // pred_check_branch
      %33 = sbr.rel (0) target = $region21
    $region20: #{_device_forward.3} parent=1 // pred_region
      _
    $region21: #{_device_forward.3} parent=1 // pred_fallthru
      _
    // Predicated region
    $region22: #{_device_forward.3} parent=1 // pred_check
      _
    $region23: #{_device_forward.3} parent=1 // pred_check_branch
      %35 = sbr.rel (0) target = $region25
    $region24: #{_device_forward.3} parent=1 // pred_region
      _
    $region25: #{_device_forward.3} parent=1 // pred_fallthru
      _
    // Predicated region
    $region26: #{_device_forward.3} parent=1 // pred_check
      _
    $region27: #{_device_forward.3} parent=1 // pred_check_branch
      %37 = sbr.rel (0) target = $region29
    $region28: #{_device_forward.3} parent=1 // pred_region
      _
    $region29: #{_device_forward.3} parent=1 // pred_fallthru
      _
    // Predicated region
    $region30: #{_device_forward.3} parent=1 // pred_check
      _
    $region31: #{_device_forward.3} parent=1 // pred_check_branch
      %39 = sbr.rel (0) target = $region33
    $region32: #{_device_forward.3} parent=1 // pred_region
      _
    $region33: #{_device_forward.3} parent=1 // pred_fallthru
      _
    // Predicated region
    $region34: #{_device_forward.3} parent=1 // pred_check
      _
    $region35: #{_device_forward.3} parent=1 // pred_check_branch
      %41 = sbr.rel (0) target = $region37
    $region36: #{_device_forward.3} parent=1 // pred_region
      %42 = dma.done [#allocation3], 16
    $region37: #{_device_forward.3} parent=1 // pred_fallthru
      _
    %43 = sfence
    %s44 = sld [smem:[#allocation2]]
    %s45 = sld [smem:[#allocation2 + $0x1]]
    %s46 = sld [smem:[#allocation2 + $0x2]]
    %v47 = vld [vmem:[%s1] sm:$0xff]
    %v48 = vld [vmem:[%s1 + $0x8] sm:$0xff]
    %v49 = vld [vmem:[%s2] sm:$0x1]
    %v51 = vlaneseq
    %v52 = vshrl.u32 %v51, 7
    %v53 = vsub.s32 0, %v52
    %v54 = vrot.slane %v49, %v53
    %v56 = vmul.f32 %v47, %v54
    %v57 = vmul.f32 %v48, %v54
    %vm58 = vcmask 261120
    %v59 = vsel %vm58, %v56, 0.0
    %60 = vadd.xlane.f32.xlu0 %v59
    %v61 = vpop.xlane.xlu0 %60
    %v62 = vsel %vm58, %v57, 0.0
    %63 = vadd.xlane.f32.xlu0 %v62
    %v64 = vpop.xlane.xlu0 %63
    %v65 = vstv %s44
    %v66 = vadd.f32 %v61, %v65
    %v67 = vadd.f32 %v64, %v65
    %v68 = vmax.f32 %v66, 0.0
    %v69 = vmax.f32 %v67, 0.0
    %v70 = vstv %s45
    %v71 = vmul.f32 %v68, %v70
    %v72 = vmul.f32 %v69, %v70
    %v73 = vstv %s46
    %v74 = vadd.f32 %v71, %v73
    %v75 = vadd.f32 %v72, %v73
    %v76 = vmax.f32 %v74, 0.0
    %v77 = vmax.f32 %v75, 0.0
    %v78 = vadd.f32 %v76, %v66
    %v79 = vadd.f32 %v77, %v67
    %v80 = vld [vmem:[%s4] sm:$0x3]
    %v82 = vlaneseq
    %v83 = vshrl.u32 %v82, 7
    %v84 = vsub.s32 0, %v83
    %v85 = vrot.slane %v80, %v84
    %87 = vbcast.lane.b32.xlu0 %v85, 256
    %v88 = vpop.permute.xlu0 %87
    %v89 = vlaneseq
    %v90 = vshrl.u32 %v89, 7
    %v91 = vsub.s32 1, %v90
    %v92 = vrot.slane %v80, %v91
    %94 = vbcast.lane.b32.xlu0 %v92, 256
    %v95 = vpop.permute.xlu0 %94
    %v98 = vadd.f32 %v78, %v88
    %v99 = vadd.f32 %v79, %v95
    %102 = vset.pattern.permute.xlu0 0
    %103 = vperm.xlu0 %102, %v98
    %v104 = vpop.permute.xlu0 %103
    %105 = vset.pattern.permute.xlu0 0
    %106 = vperm.xlu0 %105, %v99
    %v107 = vpop.permute.xlu0 %106
    %v108 = vlaneseq
    %v109 = vand.u32 %v108, 127
    %v110 = vlaneseq
    %v111 = vshrl.u32 %v110, 7
    %v112 = vsub.s32 %v109, %v111
    %v113 = vrot.slane %v104, %v112
    %v114 = vlaneseq
    %v115 = vshrl.u32 %v114, 7
    %v116 = vsub.s32 %v109, %v115
    %v117 = vrot.slane %v107, %v116
    %vm118 = vcmask 1041409
    %v119 = vsel %vm118, %v117, %v113
    %vm121 = vcmask 58368
    %v122 = vsel %vm121, %v119, -inf
    %123 = vmax.xlane.f32.xlu0 %v122
    %v124 = vpop.xlane.xlu0 %123
    %v126 = vlaneseq
    %v127 = vshrl.u32 %v126, 7
    %v128 = vsub.s32 0, %v127
    %v129 = vrot.slane %v124, %v128
    %v130 = vlaneseq
    %v131 = vshrl.u32 %v130, 7
    %v132 = vsub.s32 1, %v131
    %v133 = vrot.slane %v124, %v132
    %v136 = vsub.f32 %v98, %v129
    %v137 = vsub.f32 %v99, %v133
    %v138 = vmul.f32 %v136, 1.442695
    %v139 = vpow.pop %v138
    %v140 = vmul.f32 %v137, 1.442695
    %v141 = vpow.pop %v140
    %144 = vset.pattern.permute.xlu0 0
    %145 = vperm.xlu0 %144, %v139
    %v146 = vpop.permute.xlu0 %145
    %147 = vset.pattern.permute.xlu0 0
    %148 = vperm.xlu0 %147, %v141
    %v149 = vpop.permute.xlu0 %148
    %v150 = vlaneseq
    %v151 = vshrl.u32 %v150, 7
    %v152 = vsub.s32 %v109, %v151
    %v153 = vrot.slane %v146, %v152
    %v154 = vlaneseq
    %v155 = vshrl.u32 %v154, 7
    %v156 = vsub.s32 %v109, %v155
    %v157 = vrot.slane %v149, %v156
    %v158 = vsel %vm118, %v157, %v153
    %v160 = vsel %vm121, %v158, 0.0
    %161 = vadd.xlane.f32.xlu0 %v160
    %v162 = vpop.xlane.xlu0 %161
    %v163 = vlog2.pop %v162
    %v164 = vmul.f32 %v163, 0.6931472
    %v166 = vlaneseq
    %v167 = vshrl.u32 %v166, 7
    %v168 = vsub.s32 0, %v167
    %v169 = vrot.slane %v164, %v168
    %v170 = vlaneseq
    %v171 = vshrl.u32 %v170, 7
    %v172 = vsub.s32 1, %v171
    %v173 = vrot.slane %v164, %v172
    %v176 = vsub.f32 %v136, %v169
    %v177 = vsub.f32 %v137, %v173
    %v179 = vlaneseq
    %v180 = vshrl.u32 %v179, 7
    %v181 = vsub.s32 0, %v180
    %v182 = vrot.slane %v162, %v181
    %v183 = vlaneseq
    %v184 = vshrl.u32 %v183, 7
    %v185 = vsub.s32 1, %v184
    %v186 = vrot.slane %v162, %v185
    %v189 = vrcp.pop %v182
    %v190 = vmul.f32 %v139, %v189
    %v191 = vrcp.pop %v186
    %v192 = vmul.f32 %v141, %v191
    %vm193 = vcmp.gt.f32.partialorder %v190, 0.0
    %vm194 = vcmp.gt.f32.partialorder %v192, 0.0
    %v195 = vmul.f32 %v190, %v176
    %v196 = vmul.f32 %v192, %v177
    %v197 = vsel %vm193, %v195, 0.0
    %v198 = vsel %vm194, %v196, 0.0
    %201 = vset.pattern.permute.xlu0 0
    %202 = vperm.xlu0 %201, %v197
    %v203 = vpop.permute.xlu0 %202
    %204 = vset.pattern.permute.xlu0 0
    %205 = vperm.xlu0 %204, %v198
    %v206 = vpop.permute.xlu0 %205
    %v207 = vlaneseq
    %v208 = vshrl.u32 %v207, 7
    %v209 = vsub.s32 %v109, %v208
    %v210 = vrot.slane %v203, %v209
    %v211 = vlaneseq
    %v212 = vshrl.u32 %v211, 7
    %v213 = vsub.s32 %v109, %v212
    %v214 = vrot.slane %v206, %v213
    %v215 = vsel %vm118, %v214, %v210
    %v217 = vsel %vm121, %v215, 0.0
    %218 = vadd.xlane.f32.xlu0 %v217
    %v219 = vpop.xlane.xlu0 %218
    %v220 = vsub.f32 0.0, %v219
    %v221 = vld [vmem:[%s6] sm:$0x3]
    %v223 = vlaneseq
    %v224 = vshrl.u32 %v223, 7
    %v225 = vsub.s32 0, %v224
    %v226 = vrot.slane %v221, %v225
    %228 = vbcast.lane.b32.xlu0 %v226, 256
    %v229 = vpop.permute.xlu0 %228
    %v230 = vlaneseq
    %v231 = vshrl.u32 %v230, 7
    %v232 = vsub.s32 1, %v231
    %v233 = vrot.slane %v221, %v232
    %235 = vbcast.lane.b32.xlu0 %v233, 256
    %v236 = vpop.permute.xlu0 %235
    %v239 = vadd.f32 %v98, %v229
    %v240 = vadd.f32 %v99, %v236
    %243 = vset.pattern.permute.xlu0 0
    %244 = vperm.xlu0 %243, %v239
    %v245 = vpop.permute.xlu0 %244
    %246 = vset.pattern.permute.xlu0 0
    %247 = vperm.xlu0 %246, %v240
    %v248 = vpop.permute.xlu0 %247
    %v249 = vlaneseq
    %v250 = vshrl.u32 %v249, 7
    %v251 = vsub.s32 %v109, %v250
    %v252 = vrot.slane %v245, %v251
    %v253 = vlaneseq
    %v254 = vshrl.u32 %v253, 7
    %v255 = vsub.s32 %v109, %v254
    %v256 = vrot.slane %v248, %v255
    %v257 = vsel %vm118, %v256, %v252
    %v259 = vsel %vm121, %v257, -inf
    %260 = vmax.xlane.f32.xlu0 %v259
    %v261 = vpop.xlane.xlu0 %260
    %v263 = vlaneseq
    %v264 = vshrl.u32 %v263, 7
    %v265 = vsub.s32 0, %v264
    %v266 = vrot.slane %v261, %v265
    %v267 = vlaneseq
    %v268 = vshrl.u32 %v267, 7
    %v269 = vsub.s32 1, %v268
    %v270 = vrot.slane %v261, %v269
    %vm273 = vcmp.eq.f32.partialorder %v239, %v266
    %vm274 = vcmp.eq.f32.partialorder %v240, %v270
    %276 = vbcast.lane.b32.xlu0 %v109, 256
    %v277 = vpop.permute.xlu0 %276
    %v278 = vsel %vm273, %v277, 8
    %v279 = vsel %vm274, %v277, 8
    %280 = vset.pattern.permute.xlu0 0
    %281 = vperm.xlu0 %280, %v278
    %v282 = vpop.permute.xlu0 %281
    %283 = vset.pattern.permute.xlu0 0
    %284 = vperm.xlu0 %283, %v279
    %v285 = vpop.permute.xlu0 %284
    %v286 = vlaneseq
    %v287 = vshrl.u32 %v286, 7
    %v288 = vsub.s32 %v109, %v287
    %v289 = vrot.slane %v282, %v288
    %v290 = vlaneseq
    %v291 = vshrl.u32 %v290, 7
    %v292 = vsub.s32 %v109, %v291
    %v293 = vrot.slane %v285, %v292
    %v294 = vsel %vm118, %v293, %v289
    %v295 = vsel %vm121, %v294, 2147483647
    %v296 = vand.u32 %v295, 65535
    %v297 = vshra.s32 %v295, 16
    %v298 = vcvt.s32.f32 %v296
    %v299 = vcvt.s32.f32 %v297
    %300 = vmin.xlane.f32.xlu0 %v299
    %v301 = vpop.xlane.xlu0 %300
    %vm302 = vcmp.eq.f32.partialorder %v299, %v301
    %v303 = vsel %vm302, %v298, inf
    %304 = vmin.xlane.f32.xlu0 %v303
    %v305 = vpop.xlane.xlu0 %304
    %v306 = vcvt.f32.s32 %v305
    %v307 = vcvt.f32.s32 %v301
    %v308 = vshll.u32 %v307, 16
    %v309 = vadd.s32 %v308, %v306
    %vm310 = vcmp.eq.s32.totalorder %v109, %v309
    %313 = vset.pattern.permute.xlu0 0
    %314 = vperm.xlu0 %313, %v176
    %v315 = vpop.permute.xlu0 %314
    %316 = vset.pattern.permute.xlu0 0
    %317 = vperm.xlu0 %316, %v177
    %v318 = vpop.permute.xlu0 %317
    %v319 = vlaneseq
    %v320 = vshrl.u32 %v319, 7
    %v321 = vsub.s32 %v109, %v320
    %v322 = vrot.slane %v315, %v321
    %v323 = vlaneseq
    %v324 = vshrl.u32 %v323, 7
    %v325 = vsub.s32 %v109, %v324
    %v326 = vrot.slane %v318, %v325
    %v327 = vsel %vm118, %v326, %v322
    %v329 = vsel %vm310, %v327, 0.0
    %v330 = vsel %vm121, %v329, 0.0
    %331 = vadd.xlane.f32.xlu0 %v330
    %v332 = vpop.xlane.xlu0 %331
    %v333 = vsel %vm310, 1, 0
    %v334 = vcvt.s32.f32 %v333
    %v335 = vlaneseq
    %v336 = vshrl.u32 %v335, 7
    %v337 = vsub.s32 0, %v336
    %v338 = vrot.slane %v334, %v337
    %340 = vbcast.lane.b32.xlu0 %v338, 256
    %v341 = vpop.permute.xlu0 %340
    %v342 = vlaneseq
    %v343 = vshrl.u32 %v342, 7
    %v344 = vsub.s32 1, %v343
    %v345 = vrot.slane %v334, %v344
    %347 = vbcast.lane.b32.xlu0 %v345, 256
    %v348 = vpop.permute.xlu0 %347
    %v349 = vmul.f32 %v47, %v341
    %v350 = vmul.f32 %v48, %v348
    %v351 = vsel %vm58, %v349, 0.0
    %v352 = vrot.slane %v351, 4
    %v353 = vadd.f32 %v351, %v352
    %v354 = vrot.slane %v353, 2
    %v355 = vadd.f32 %v353, %v354
    %v356 = vrot.slane %v355, 1
    %v357 = vadd.f32 %v355, %v356
    %v358 = vsel %vm58, %v350, 0.0
    %v359 = vrot.slane %v358, 4
    %v360 = vadd.f32 %v358, %v359
    %v361 = vrot.slane %v360, 2
    %v362 = vadd.f32 %v360, %v361
    %v363 = vrot.slane %v362, 1
    %v364 = vadd.f32 %v362, %v363
    %v365 = vld [vmem:[%s5] sm:$0xff]
    %v366 = vld [vmem:[%s5 + $0x8] sm:$0xff]
    %v367 = vmul.f32 %v365, %v341
    %v368 = vmul.f32 %v366, %v348
    %vm369 = vcmask 64512
    %v370 = vsel %vm369, %v367, 0.0
    %v371 = vrot.slane %v370, 4
    %v372 = vadd.f32 %v370, %v371
    %v373 = vrot.slane %v372, 2
    %v374 = vadd.f32 %v372, %v373
    %v375 = vrot.slane %v374, 1
    %v376 = vadd.f32 %v374, %v375
    %v377 = vsel %vm369, %v368, 0.0
    %v378 = vrot.slane %v377, 4
    %v379 = vadd.f32 %v377, %v378
    %v380 = vrot.slane %v379, 2
    %v381 = vadd.f32 %v379, %v380
    %v382 = vrot.slane %v381, 1
    %v383 = vadd.f32 %v381, %v382
    %vm384 = vcmp.gt.f32.partialorder %v376, 0.5
    %vm385 = vcmp.gt.f32.partialorder %v383, 0.5
    %v386 = vsel %vm384, 0.0, -inf
    %v387 = vsel %vm385, 0.0, -inf
    %v388 = vld [vmem:[%s3] sm:$0xff]
    %v389 = vld [vmem:[%s3 + $0x8] sm:$0xff]
    %v390 = vld [vmem:[%s3 + $0x10] sm:$0xff]
    %v391 = vld [vmem:[%s3 + $0x18] sm:$0xff]
    %v394 = vsel %vm118, %v364, %v357
    %v395 = vsel %vm58, %v394, 0
    %v398 = vsel %vm58, %v388, 0
    %v401 = vsel %vm58, %v389, 0
    %v404 = vsel %vm58, %v390, 0
    %v407 = vsel %vm58, %v391, 0
    %409 = vmatprep.subr.mxu0 0.0
    %410 = vmatpush1.xpose.msra.mxu0 0.0
    %411 = vmatprep.subr.mxu0 0.0
    %412 = vmatpush1.xpose.msra.mxu0 0.0
    %413 = vmatprep.subr.mxu0 0.0
    %414 = vmatpush1.xpose.msra.mxu0 0.0
    %415 = vmatprep.subr.mxu0 0.0
    %416 = vmatpush1.xpose.msra.mxu0 0.0
    %417 = vmatprep.subr.mxu0 0.0
    %418 = vmatpush1.xpose.msra.mxu0 0.0
    %419 = vmatprep.subr.mxu0 0.0
    %420 = vmatpush1.xpose.msra.mxu0 0.0
    %421 = vmatprep.subr.mxu0 0.0
    %422 = vmatpush1.xpose.msra.mxu0 0.0
    %423 = vmatprep.subr.mxu0 0.0
    %424 = vmatpush1.xpose.msra.mxu0 0.0
    %425 = vmatprep.subr.mxu0 0.0
    %426 = vmatpush1.xpose.msra.mxu0 0.0
    %427 = vmatprep.subr.mxu0 0.0
    %428 = vmatpush1.xpose.msra.mxu0 0.0
    %429 = vmatprep.subr.mxu0 0.0
    %430 = vmatpush1.xpose.msra.mxu0 0.0
    %431 = vmatprep.subr.mxu0 0.0
    %432 = vmatpush1.xpose.msra.mxu0 0.0
    %433 = vmatprep.subr.mxu0 0.0
    %434 = vmatpush1.xpose.msra.mxu0 %v407
    %435 = vmatprep.subr.mxu0 0.0
    %436 = vmatpush1.xpose.msra.mxu0 %v404
    %437 = vmatprep.subr.mxu0 0.0
    %438 = vmatpush1.xpose.msra.mxu0 %v401
    %439 = vmatprep.subr.mxu0 0.0
    %440 = vmatpush1.xpose.msra.mxu0 %v398
    %441 = vmatprep.subr.mxu0 0.0
    %442 = vmatpush2.xpose.msra.mxu0 0.0
    %443 = vmatprep.subr.mxu0 0.0
    %444 = vmatpush2.xpose.msra.mxu0 0.0
    %445 = vmatprep.subr.mxu0 0.0
    %446 = vmatpush2.xpose.msra.mxu0 0.0
    %447 = vmatprep.subr.mxu0 0.0
    %448 = vmatpush2.xpose.msra.mxu0 0.0
    %449 = vmatprep.subr.mxu0 0.0
    %450 = vmatpush2.xpose.msra.mxu0 0.0
    %451 = vmatprep.subr.mxu0 0.0
    %452 = vmatpush2.xpose.msra.mxu0 0.0
    %453 = vmatprep.subr.mxu0 0.0
    %454 = vmatpush2.xpose.msra.mxu0 0.0
    %455 = vmatprep.subr.mxu0 0.0
    %456 = vmatpush2.xpose.msra.mxu0 0.0
    %457 = vmatprep.subr.mxu0 0.0
    %458 = vmatpush2.xpose.msra.mxu0 0.0
    %459 = vmatprep.subr.mxu0 0.0
    %460 = vmatpush2.xpose.msra.mxu0 0.0
    %461 = vmatprep.subr.mxu0 0.0
    %462 = vmatpush2.xpose.msra.mxu0 0.0
    %463 = vmatprep.subr.mxu0 0.0
    %464 = vmatpush2.xpose.msra.mxu0 0.0
    %465 = vmatprep.subr.mxu0 0.0
    %466 = vmatpush2.xpose.msra.mxu0 0.0
    %467 = vmatprep.subr.mxu0 0.0
    %468 = vmatpush2.xpose.msra.mxu0 0.0
    %469 = vmatprep.subr.mxu0 0.0
    %470 = vmatpush2.xpose.msra.mxu0 0.0
    %471 = vmatprep.subr.mxu0 0.0
    %472 = vmatpush2.xpose.msra.mxu0 0.0
    %473 = vmatprep.mubr.f32.mxu0 0.0
    %474 = vmatmul.mubr.f32.gmra.mxu0 %v395
    %v475 = vpop.f32.mrf.mxu0
    %v476 = vadd.f32 0.0, %v475
    %v477 = vpop.f32.mrf.mxu0
    %478 = vdwg.mxu0
    %v479 = vtanh.pop %v476
    %v482 = vunpack.c.l.s4 1966171168
    %v483 = vunpack.c.0.s8 %v482
    %v484 = vlaneseq
    %v485 = vshrl.u32 %v484, 7
    %v486 = vsub.s32 %v483, %v485
    %v487 = vrot.slane %v479, %v486
    %v488 = vcombine.high %v487, %v487
    %v490 = vunpack.c.l.s4 1966171168
    %v491 = vunpack.c.0.s8 %v490
    %v492 = vlaneseq
    %v493 = vshrl.u32 %v492, 7
    %v494 = vsub.s32 %v491, %v493
    %v495 = vrot.slane %v487, %v494
    %v497 = vunpack.c.l.s4 1966171168
    %v498 = vunpack.c.0.s8 %v497
    %v499 = vlaneseq
    %v500 = vshrl.u32 %v499, 7
    %v501 = vsub.s32 %v498, %v500
    %v502 = vrot.slane %v488, %v501
    %v503 = vlaneseq
    %v504 = vshrl.u32 %v503, 7
    %v505 = vsub.s32 0, %v504
    %v506 = vrot.slane %v495, %v505
    %v507 = vlaneseq
    %v508 = vshrl.u32 %v507, 7
    %v509 = vsub.s32 0, %v508
    %v510 = vrot.slane %v502, %v509
    %v513 = vmul.f32 %v506, %v47
    %v514 = vmul.f32 %v510, %v48
    %v515 = vsel %vm58, %v513, 0.0
    %516 = vadd.xlane.f32.xlu0 %v515
    %v517 = vpop.xlane.xlu0 %516
    %v518 = vsel %vm58, %v514, 0.0
    %519 = vadd.xlane.f32.xlu0 %v518
    %v520 = vpop.xlane.xlu0 %519
    %524 = vbcast.lane.b32.xlu0 %v386, 256
    %v525 = vpop.permute.xlu0 %524
    %527 = vbcast.lane.b32.xlu0 %v387, 256
    %v528 = vpop.permute.xlu0 %527
    %v531 = vadd.f32 %v517, %v525
    %v532 = vadd.f32 %v520, %v528
    %535 = vset.pattern.permute.xlu0 0
    %536 = vperm.xlu0 %535, %v531
    %v537 = vpop.permute.xlu0 %536
    %538 = vset.pattern.permute.xlu0 0
    %539 = vperm.xlu0 %538, %v532
    %v540 = vpop.permute.xlu0 %539
    %v541 = vlaneseq
    %v542 = vshrl.u32 %v541, 7
    %v543 = vsub.s32 %v109, %v542
    %v544 = vrot.slane %v537, %v543
    %v545 = vlaneseq
    %v546 = vshrl.u32 %v545, 7
    %v547 = vsub.s32 %v109, %v546
    %v548 = vrot.slane %v540, %v547
    %v549 = vsel %vm118, %v548, %v544
    %v551 = vsel %vm121, %v549, -inf
    %552 = vmax.xlane.f32.xlu0 %v551
    %v553 = vpop.xlane.xlu0 %552
    %v555 = vlaneseq
    %v556 = vshrl.u32 %v555, 7
    %v557 = vsub.s32 0, %v556
    %v558 = vrot.slane %v553, %v557
    %v559 = vlaneseq
    %v560 = vshrl.u32 %v559, 7
    %v561 = vsub.s32 1, %v560
    %v562 = vrot.slane %v553, %v561
    %v565 = vsub.f32 %v531, %v558
    %v566 = vsub.f32 %v532, %v562
    %v567 = vmul.f32 %v565, 1.442695
    %v568 = vpow.pop %v567
    %v569 = vmul.f32 %v566, 1.442695
    %v570 = vpow.pop %v569
    %573 = vset.pattern.permute.xlu0 0
    %574 = vperm.xlu0 %573, %v568
    %v575 = vpop.permute.xlu0 %574
    %576 = vset.pattern.permute.xlu0 0
    %577 = vperm.xlu0 %576, %v570
    %v578 = vpop.permute.xlu0 %577
    %v579 = vlaneseq
    %v580 = vshrl.u32 %v579, 7
    %v581 = vsub.s32 %v109, %v580
    %v582 = vrot.slane %v575, %v581
    %v583 = vlaneseq
    %v584 = vshrl.u32 %v583, 7
    %v585 = vsub.s32 %v109, %v584
    %v586 = vrot.slane %v578, %v585
    %v587 = vsel %vm118, %v586, %v582
    %v589 = vsel %vm121, %v587, 0.0
    %590 = vadd.xlane.f32.xlu0 %v589
    %v591 = vpop.xlane.xlu0 %590
    %v592 = vlog2.pop %v591
    %v593 = vmul.f32 %v592, 0.6931472
    %v595 = vlaneseq
    %v596 = vshrl.u32 %v595, 7
    %v597 = vsub.s32 0, %v596
    %v598 = vrot.slane %v593, %v597
    %v599 = vlaneseq
    %v600 = vshrl.u32 %v599, 7
    %v601 = vsub.s32 1, %v600
    %v602 = vrot.slane %v593, %v601
    %v605 = vsub.f32 %v565, %v598
    %v606 = vsub.f32 %v566, %v602
    %v608 = vlaneseq
    %v609 = vshrl.u32 %v608, 7
    %v610 = vsub.s32 0, %v609
    %v611 = vrot.slane %v591, %v610
    %v612 = vlaneseq
    %v613 = vshrl.u32 %v612, 7
    %v614 = vsub.s32 1, %v613
    %v615 = vrot.slane %v591, %v614
    %v618 = vrcp.pop %v611
    %v619 = vmul.f32 %v568, %v618
    %v620 = vrcp.pop %v615
    %v621 = vmul.f32 %v570, %v620
    %vm622 = vcmp.gt.f32.partialorder %v619, 0.0
    %vm623 = vcmp.gt.f32.partialorder %v621, 0.0
    %v624 = vmul.f32 %v619, %v605
    %v625 = vmul.f32 %v621, %v606
    %v626 = vsel %vm622, %v624, 0.0
    %v627 = vsel %vm623, %v625, 0.0
    %630 = vset.pattern.permute.xlu0 0
    %631 = vperm.xlu0 %630, %v626
    %v632 = vpop.permute.xlu0 %631
    %633 = vset.pattern.permute.xlu0 0
    %634 = vperm.xlu0 %633, %v627
    %v635 = vpop.permute.xlu0 %634
    %v636 = vlaneseq
    %v637 = vshrl.u32 %v636, 7
    %v638 = vsub.s32 %v109, %v637
    %v639 = vrot.slane %v632, %v638
    %v640 = vlaneseq
    %v641 = vshrl.u32 %v640, 7
    %v642 = vsub.s32 %v109, %v641
    %v643 = vrot.slane %v635, %v642
    %v644 = vsel %vm118, %v643, %v639
    %v646 = vsel %vm121, %v644, 0.0
    %647 = vadd.xlane.f32.xlu0 %v646
    %v648 = vpop.xlane.xlu0 %647
    %v649 = vsub.f32 0.0, %v648
    %v650 = vld [vmem:[%s7] sm:$0x3]
    %v652 = vlaneseq
    %v653 = vshrl.u32 %v652, 7
    %v654 = vsub.s32 0, %v653
    %v655 = vrot.slane %v650, %v654
    %657 = vbcast.lane.b32.xlu0 %v655, 256
    %v658 = vpop.permute.xlu0 %657
    %v659 = vlaneseq
    %v660 = vshrl.u32 %v659, 7
    %v661 = vsub.s32 1, %v660
    %v662 = vrot.slane %v650, %v661
    %664 = vbcast.lane.b32.xlu0 %v662, 256
    %v665 = vpop.permute.xlu0 %664
    %v668 = vadd.f32 %v531, %v658
    %v669 = vadd.f32 %v532, %v665
    %672 = vset.pattern.permute.xlu0 0
    %673 = vperm.xlu0 %672, %v668
    %v674 = vpop.permute.xlu0 %673
    %675 = vset.pattern.permute.xlu0 0
    %676 = vperm.xlu0 %675, %v669
    %v677 = vpop.permute.xlu0 %676
    %v678 = vlaneseq
    %v679 = vshrl.u32 %v678, 7
    %v680 = vsub.s32 %v109, %v679
    %v681 = vrot.slane %v674, %v680
    %v682 = vlaneseq
    %v683 = vshrl.u32 %v682, 7
    %v684 = vsub.s32 %v109, %v683
    %v685 = vrot.slane %v677, %v684
    %v686 = vsel %vm118, %v685, %v681
    %v688 = vsel %vm121, %v686, -inf
    %689 = vmax.xlane.f32.xlu0 %v688
    %v690 = vpop.xlane.xlu0 %689
    %v692 = vlaneseq
    %v693 = vshrl.u32 %v692, 7
    %v694 = vsub.s32 0, %v693
    %v695 = vrot.slane %v690, %v694
    %v696 = vlaneseq
    %v697 = vshrl.u32 %v696, 7
    %v698 = vsub.s32 1, %v697
    %v699 = vrot.slane %v690, %v698
    %vm702 = vcmp.eq.f32.partialorder %v668, %v695
    %vm703 = vcmp.eq.f32.partialorder %v669, %v699
    %v704 = vsel %vm702, %v277, 8
    %v705 = vsel %vm703, %v277, 8
    %706 = vset.pattern.permute.xlu0 0
    %707 = vperm.xlu0 %706, %v704
    %v708 = vpop.permute.xlu0 %707
    %709 = vset.pattern.permute.xlu0 0
    %710 = vperm.xlu0 %709, %v705
    %v711 = vpop.permute.xlu0 %710
    %v712 = vlaneseq
    %v713 = vshrl.u32 %v712, 7
    %v714 = vsub.s32 %v109, %v713
    %v715 = vrot.slane %v708, %v714
    %v716 = vlaneseq
    %v717 = vshrl.u32 %v716, 7
    %v718 = vsub.s32 %v109, %v717
    %v719 = vrot.slane %v711, %v718
    %v720 = vsel %vm118, %v719, %v715
    %v721 = vsel %vm121, %v720, 2147483647
    %v722 = vand.u32 %v721, 65535
    %v723 = vshra.s32 %v721, 16
    %v724 = vcvt.s32.f32 %v722
    %v725 = vcvt.s32.f32 %v723
    %726 = vmin.xlane.f32.xlu0 %v725
    %v727 = vpop.xlane.xlu0 %726
    %vm728 = vcmp.eq.f32.partialorder %v725, %v727
    %v729 = vsel %vm728, %v724, inf
    %730 = vmin.xlane.f32.xlu0 %v729
    %v731 = vpop.xlane.xlu0 %730
    %v732 = vcvt.f32.s32 %v731
    %v733 = vcvt.f32.s32 %v727
    %v734 = vshll.u32 %v733, 16
    %v735 = vadd.s32 %v734, %v732
    %vm736 = vcmp.eq.s32.totalorder %v109, %v735
    %739 = vset.pattern.permute.xlu0 0
    %740 = vperm.xlu0 %739, %v605
    %v741 = vpop.permute.xlu0 %740
    %742 = vset.pattern.permute.xlu0 0
    %743 = vperm.xlu0 %742, %v606
    %v744 = vpop.permute.xlu0 %743
    %v745 = vlaneseq
    %v746 = vshrl.u32 %v745, 7
    %v747 = vsub.s32 %v109, %v746
    %v748 = vrot.slane %v741, %v747
    %v749 = vlaneseq
    %v750 = vshrl.u32 %v749, 7
    %v751 = vsub.s32 %v109, %v750
    %v752 = vrot.slane %v744, %v751
    %v753 = vsel %vm118, %v752, %v748
    %v755 = vsel %vm736, %v753, 0.0
    %v756 = vsel %vm121, %v755, 0.0
    %757 = vadd.xlane.f32.xlu0 %v756
    %v758 = vpop.xlane.xlu0 %757
    %vm759 = vcmp.eq.s32.totalorder %v109, 0
    %v760 = vsel %vm759, %v309, %v735
    %vm761 = vcmask 9216
    %762 = vst.msk [vmem:[%s8] sm:$0x3] %vm761, %v760
    %vm763 = vcmp.eq.s32.totalorder %v109, 1
    %vm764 = vcmp.eq.s32.totalorder %v109, 2
    %v765 = vsel %vm764, %v220, %v649
    %v766 = vsel %vm763, %v758, %v765
    %v767 = vsel %vm759, %v332, %v766
    %vm768 = vcmask 25600
    %769 = vst.msk [vmem:[%s9] sm:$0x3] %vm768, %v767
    // Predicated region
    $region38: #{_device_forward.3} parent=1 // pred_check
      _
    $region39: #{_device_forward.3} parent=1 // pred_check_branch
      %771 = sbr.rel (0) target = $region41
    $region40: #{_device_forward.3} parent=1 // pred_region
      _
    $region41: #{_device_forward.3} parent=1 // pred_fallthru
      _
    // Predicated region
    $region42: #{_device_forward.3} parent=1 // pred_check
      _
    $region43: #{_device_forward.3} parent=1 // pred_check_branch
      %773 = sbr.rel (0) target = $region45
    $region44: #{_device_forward.3} parent=1 // pred_region
      _
    $region45: #{_device_forward.3} parent=1 // pred_fallthru
      _
    // Predicated region
    $region46: #{_device_forward.3} parent=1 // pred_check
      _
    $region47: #{_device_forward.3} parent=1 // pred_check_branch
      %775 = sbr.rel (0) target = $region49
    $region48: #{_device_forward.3} parent=1 // pred_region
      _
    $region49: #{_device_forward.3} parent=1 // pred_fallthru
      _
    // Predicated region
    $region50: #{_device_forward.3} parent=1 // pred_check
      _
    $region51: #{_device_forward.3} parent=1 // pred_check_branch
      %777 = sbr.rel (0) target = $region53
    $region52: #{_device_forward.3} parent=1 // pred_region
      _
    $region53: #{_device_forward.3} parent=1 // pred_fallthru
      _
    %778 = vsyncpa [#allocation3], 1

</llo_original>
